<compile_context>
chip_gen: v7x
topology: tpu7x:2x2x1
jax: 0.10.0
libtpu: 0.0.40
codegen_flags: <defaults>
</compile_context>

<pallas_src>
import functools

import jax
import jax.numpy as jnp
from jax.experimental import pallas as pl
from jax.experimental.pallas import tpu as pltpu

LANE = 128


def _round_up(n, m):
    return ((n + m - 1) // m) * m


def _device_traits():
    """(num_tensorcores_per_chip, has_bf16_eup) from the local device kind."""
    kind = jax.devices()[0].device_kind.lower()
    # v5e / v6e ("lite") chips have a single TensorCore; v7x (and v4/v5p) have 2.
    single_tc = ("lite" in kind) or ("v5e" in kind) or ("v6e" in kind)
    num_tc = 1 if single_tc else 2
    # bf16 EUP (tanh) path exists on v6e / v7x; keep f32 tanh on v5e and older.
    bf16_eup = ("v6" in kind) or ("v7" in kind)
    return num_tc, bf16_eup


# ----------------------------------------------------------------------------- kernel
def gan_kernel(x_ref,
               g_w1_ref, g_b1_ref, g_w2_ref, g_b2_ref,
               d_w1_ref, d_b1_ref, d_w2t_ref, d_b2_ref,
               out_ref, *, bf16_tanh):
    x = x_ref[...]                                                     # [TM, Lp] bf16

    # ---------------- generator ----------------
    h = jnp.dot(x, g_w1_ref[...],
                preferred_element_type=jnp.float32) + g_b1_ref[...]    # [TM, Hp] f32
    h = jnp.maximum(h, 0.0)                                            # ReLU (VPU)

    img = jnp.dot(h.astype(jnp.bfloat16), g_w2_ref[...],
                  preferred_element_type=jnp.float32) + g_b2_ref[...]  # [TM, Ip] f32
    if bf16_tanh:
        # v6e/v7x: EUP has a bf16 path (~2x); result feeds a bf16 matmul anyway.
        img = jnp.tanh(img.astype(jnp.bfloat16))                       # [TM, Ip] bf16
    else:
        # v5e: no bf16 EUP — tanh in f32, then cast once for the MXU.
        img = jnp.tanh(img).astype(jnp.bfloat16)

    # ---------------- discriminator ----------------
    d = jnp.dot(img, d_w1_ref[...],
                preferred_element_type=jnp.float32) + d_b1_ref[...]    # [TM, Hp] f32
    d = jnp.maximum(d, 0.2 * d)                                        # LeakyReLU(0.2)

    # Final [hidden, 1] projection, produced lane-dense as a [1, TM] row:
    # d_w2t is pre-transposed [1, Hp] on the host (padded cols zero), so this is
    # a tiny M=1 contraction over the hidden lanes; output lands along lanes and
    # the store is unmasked.
    logits = jnp.einsum("oh,mh->om", d_w2t_ref[...], d,
                        preferred_element_type=jnp.float32) + d_b2_ref[...]  # [1, TM]
    out_ref[...] = jax.nn.sigmoid(logits).reshape(out_ref.shape)       # [1, 1, TM]


# ----------------------------------------------------------------------------- wrapper
def prepare_params(params):
    """One-time host-side layout plumbing: pad feature dims to 128, pre-transpose
    d_w2, and cast matmul weights to bf16 (biases / final projection stay f32)."""
    g_w1, g_b1, g_w2, g_b2, d_w1, d_b1, d_w2, d_b2 = params
    L, H = g_w1.shape
    I = g_w2.shape[1]
    Lp, Hp, Ip = _round_up(L, LANE), _round_up(H, LANE), _round_up(I, LANE)

    def pad2(a, r, c):
        return jnp.pad(a, ((0, r - a.shape[0]), (0, c - a.shape[1])))

    g_w1p = pad2(g_w1, Lp, Hp).astype(jnp.bfloat16)
    g_b1p = pad2(g_b1, 1, Hp)
    g_w2p = pad2(g_w2, Hp, Ip).astype(jnp.bfloat16)
    g_b2p = pad2(g_b2, 1, Ip)
    d_w1p = pad2(d_w1, Ip, Hp).astype(jnp.bfloat16)
    d_b1p = pad2(d_b1, 1, Hp)
    d_w2t = pad2(d_w2.T, 1, Hp)           # [1, Hp] f32, padded cols = 0
    d_b2p = d_b2                          # [1, 1]   f32
    return (g_w1p, g_b1p, g_w2p, g_b2p, d_w1p, d_b1p, d_w2t, d_b2p)


@functools.partial(jax.jit, static_argnames=("max_tile",))
def gan_forward(x, prepped, *, max_tile=1024):
    (g_w1p, g_b1p, g_w2p, g_b2p, d_w1p, d_b1p, d_w2t, d_b2p) = prepped
    B, L = x.shape
    Lp, Hp = g_w1p.shape
    Ip = g_w2p.shape[1]

    num_tc, bf16_tanh = _device_traits()

    # Tile / grid selection:
    #   * single-TC chips (v5e/v6e): grid=1 (tm=Bp) until the tile would exceed
    #     ~max_tile rows — per-grid-step overhead dominates at these dims.
    #   * 2-TC chips (v7x): keep the grid a multiple of 2 so both TensorCores get
    #     work; VMEM is a non-issue here (all weights + a 1024-row tile << 10 MiB).
    num_tiles = max(1, num_tc * -(-B // (num_tc * max_tile)))
    tm = _round_up(-(-B // num_tiles), 8)
    Bp = num_tiles * tm

    # Pad batch to a tile multiple and latent to the lane-dense width; cast the
    # activation stream to bf16 once here (halves the input DMA traffic).
    xp = jnp.zeros((Bp, Lp), jnp.bfloat16).at[:B, :L].set(x.astype(jnp.bfloat16))

    weights = (g_w1p, g_b1p, g_w2p, g_b2p, d_w1p, d_b1p, d_w2t, d_b2p)

    cost = pl.CostEstimate(
        flops=2 * Bp * (Lp * Hp + Hp * Ip + Ip * Hp + Hp),
        transcendentals=Bp * (Ip + 2),
        bytes_accessed=int(xp.size * xp.dtype.itemsize
                           + sum(w.size * w.dtype.itemsize for w in weights)
                           + Bp * 4),
    )

    kernel = functools.partial(gan_kernel, bf16_tanh=bf16_tanh)

    out = pl.pallas_call(
        kernel,
        # Lane-dense output: one [1, tm] row per tile; reshaped to [B, 1] below.
        out_shape=jax.ShapeDtypeStruct((num_tiles, 1, tm), jnp.float32),
        grid=(num_tiles,),
        in_specs=[
            # activation tiles stream over the batch grid
            pl.BlockSpec((tm, Lp), lambda i: (i, 0)),
            # weights/biases: constant index_map -> stay resident in VMEM
            pl.BlockSpec(g_w1p.shape, lambda i: (0, 0)),
            pl.BlockSpec(g_b1p.shape, lambda i: (0, 0)),
            pl.BlockSpec(g_w2p.shape, lambda i: (0, 0)),
            pl.BlockSpec(g_b2p.shape, lambda i: (0, 0)),
            pl.BlockSpec(d_w1p.shape, lambda i: (0, 0)),
            pl.BlockSpec(d_b1p.shape, lambda i: (0, 0)),
            pl.BlockSpec(d_w2t.shape, lambda i: (0, 0)),
            pl.BlockSpec(d_b2p.shape, lambda i: (0, 0)),
        ],
        out_specs=pl.BlockSpec((1, 1, tm), lambda i: (i, 0, 0)),
        compiler_params=pltpu.CompilerParams(
            dimension_semantics=("parallel",),   # shard batch tiles across TCs on v7x
        ),
        cost_estimate=cost,
    )(xp, *weights)

    return out.reshape(Bp, 1)[:B]


# ----------------------------------------------------------------------------- params / reference
def init_params(key, latent_dim, hidden_dim, img_dim):
    ks = jax.random.split(key, 8)

    def lin(kw, kb, fan_in, fan_out):
        bound = 1.0 / jnp.sqrt(fan_in)
        w = jax.random.uniform(kw, (fan_in, fan_out), jnp.float32, -bound, bound)
        b = jax.random.uniform(kb, (1, fan_out), jnp.float32, -bound, bound)
        return w, b

    g_w1, g_b1 = lin(ks[0], ks[1], latent_dim, hidden_dim)
    g_w2, g_b2 = lin(ks[2], ks[3], hidden_dim, img_dim)
    d_w1, d_b1 = lin(ks[4], ks[5], img_dim, hidden_dim)
    d_w2, d_b2 = lin(ks[6], ks[7], hidden_dim, 1)
    return (g_w1, g_b1, g_w2, g_b2, d_w1, d_b1, d_w2, d_b2)


def gan_ref(x, params):
    """Pure-JAX (f32) reference for correctness checking."""
    (g_w1, g_b1, g_w2, g_b2, d_w1, d_b1, d_w2, d_b2) = params
    h = jnp.maximum(x @ g_w1 + g_b1, 0.0)
    img = jnp.tanh(h @ g_w2 + g_b2)
    d = img @ d_w1 + d_b1
    d = jnp.where(d > 0.0, d, 0.2 * d)
    return jax.nn.sigmoid(d @ d_w2 + d_b2)


# ----------------------------------------------------------------------------- main
if __name__ == "__main__":
    batch, latent_dim, hidden_dim, img_dim = 256, 32, 64, 128

    key = jax.random.PRNGKey(0)
    k_x, k_p = jax.random.split(key)
    x = jax.random.normal(k_x, (batch, latent_dim), jnp.float32)
    params = init_params(k_p, latent_dim, hidden_dim, img_dim)
    prepped = prepare_params(params)

    out = jax.block_until_ready(gan_forward(x, prepped))
    ref = gan_ref(x, params)

    assert out.shape == (batch, 1), out.shape
    # bf16 MXU operands (and bf16 tanh on v6e/v7x) with f32 accumulation ->
    # loosened tolerance vs. the f32 reference.
    assert jnp.allclose(out, ref, atol=2.5e-2, rtol=2.5e-2), "mismatch vs reference"
    print("KERNEL_OK")
</pallas_src>

<mosaic_0001>
module attributes {stable_mosaic.version = 11 : i64} {
  func.func @gan_kernel(%arg0: i32, %arg1: memref<128x128xbf16, #tpu.memory_space<vmem>>, %arg2: memref<128x128xbf16, #tpu.memory_space<vmem>>, %arg3: memref<1x128xf32, #tpu.memory_space<vmem>>, %arg4: memref<128x128xbf16, #tpu.memory_space<vmem>>, %arg5: memref<1x128xf32, #tpu.memory_space<vmem>>, %arg6: memref<128x128xbf16, #tpu.memory_space<vmem>>, %arg7: memref<1x128xf32, #tpu.memory_space<vmem>>, %arg8: memref<1x128xf32, #tpu.memory_space<vmem>>, %arg9: memref<1x1xf32, #tpu.memory_space<vmem>>, %arg10: memref<1x1x128xf32, #tpu.memory_space<vmem>>) attributes {dimension_semantics = [#tpu.dimension_semantics<parallel>], iteration_bounds = array<i64: 2>, scalar_prefetch = 0 : i64, scratch_operands = 0 : i64, tpu.core_type = #tpu.core_type<tc>, window_params = [{transform_indices = @transform_0, window_bounds = array<i64: 128, 128>}, {pipeline_mode = #tpu.pipeline_mode<synchronous>, transform_indices = @transform_1, window_bounds = array<i64: 128, 128>}, {pipeline_mode = #tpu.pipeline_mode<synchronous>, transform_indices = @transform_2, window_bounds = array<i64: 1, 128>}, {pipeline_mode = #tpu.pipeline_mode<synchronous>, transform_indices = @transform_3, window_bounds = array<i64: 128, 128>}, {pipeline_mode = #tpu.pipeline_mode<synchronous>, transform_indices = @transform_4, window_bounds = array<i64: 1, 128>}, {pipeline_mode = #tpu.pipeline_mode<synchronous>, transform_indices = @transform_5, window_bounds = array<i64: 128, 128>}, {pipeline_mode = #tpu.pipeline_mode<synchronous>, transform_indices = @transform_6, window_bounds = array<i64: 1, 128>}, {pipeline_mode = #tpu.pipeline_mode<synchronous>, transform_indices = @transform_7, window_bounds = array<i64: 1, 128>}, {pipeline_mode = #tpu.pipeline_mode<synchronous>, transform_indices = @transform_8, window_bounds = array<i64: 1, 1>}, {transform_indices = @transform_9, window_bounds = array<i64: 1, 1, 128>}]} {
    %c0 = arith.constant 0 : index
    %c0_0 = arith.constant 0 : index
    %0 = vector.load %arg1[%c0, %c0_0] : memref<128x128xbf16, #tpu.memory_space<vmem>>, vector<128x128xbf16>
    %c0_1 = arith.constant 0 : index
    %c0_2 = arith.constant 0 : index
    %1 = vector.load %arg2[%c0_1, %c0_2] : memref<128x128xbf16, #tpu.memory_space<vmem>>, vector<128x128xbf16>
    %cst = arith.constant dense<0.000000e+00> : vector<128x128xf32>
    %2 = tpu.matmul %0, %1, %cst {dimension_numbers = #tpu.dot_dimension_numbers<[1], [0], [0], [1], [0, 0, 1, 1], [], []>} : vector<128x128xbf16>, vector<128x128xbf16>, vector<128x128xf32> -> vector<128x128xf32>
    %c0_3 = arith.constant 0 : index
    %c0_4 = arith.constant 0 : index
    %3 = vector.load %arg3[%c0_3, %c0_4] : memref<1x128xf32, #tpu.memory_space<vmem>>, vector<1x128xf32>
    %4 = vector.broadcast %3 : vector<1x128xf32> to vector<128x128xf32>
    %5 = arith.addf %2, %4 : vector<128x128xf32>
    %cst_5 = arith.constant 0.000000e+00 : f32
    %6 = vector.broadcast %cst_5 : f32 to vector<128x128xf32>
    %7 = arith.maximumf %5, %6 : vector<128x128xf32>
    %8 = arith.truncf %7 : vector<128x128xf32> to vector<128x128xbf16>
    %c0_6 = arith.constant 0 : index
    %c0_7 = arith.constant 0 : index
    %9 = vector.load %arg4[%c0_6, %c0_7] : memref<128x128xbf16, #tpu.memory_space<vmem>>, vector<128x128xbf16>
    %cst_8 = arith.constant dense<0.000000e+00> : vector<128x128xf32>
    %10 = tpu.matmul %8, %9, %cst_8 {dimension_numbers = #tpu.dot_dimension_numbers<[1], [0], [0], [1], [0, 0, 1, 1], [], []>} : vector<128x128xbf16>, vector<128x128xbf16>, vector<128x128xf32> -> vector<128x128xf32>
    %c0_9 = arith.constant 0 : index
    %c0_10 = arith.constant 0 : index
    %11 = vector.load %arg5[%c0_9, %c0_10] : memref<1x128xf32, #tpu.memory_space<vmem>>, vector<1x128xf32>
    %12 = vector.broadcast %11 : vector<1x128xf32> to vector<128x128xf32>
    %13 = arith.addf %10, %12 : vector<128x128xf32>
    %14 = math.tanh %13 : vector<128x128xf32>
    %15 = arith.truncf %14 : vector<128x128xf32> to vector<128x128xbf16>
    %c0_11 = arith.constant 0 : index
    %c0_12 = arith.constant 0 : index
    %16 = vector.load %arg6[%c0_11, %c0_12] : memref<128x128xbf16, #tpu.memory_space<vmem>>, vector<128x128xbf16>
    %cst_13 = arith.constant dense<0.000000e+00> : vector<128x128xf32>
    %17 = tpu.matmul %15, %16, %cst_13 {dimension_numbers = #tpu.dot_dimension_numbers<[1], [0], [0], [1], [0, 0, 1, 1], [], []>} : vector<128x128xbf16>, vector<128x128xbf16>, vector<128x128xf32> -> vector<128x128xf32>
    %c0_14 = arith.constant 0 : index
    %c0_15 = arith.constant 0 : index
    %18 = vector.load %arg7[%c0_14, %c0_15] : memref<1x128xf32, #tpu.memory_space<vmem>>, vector<1x128xf32>
    %19 = vector.broadcast %18 : vector<1x128xf32> to vector<128x128xf32>
    %20 = arith.addf %17, %19 : vector<128x128xf32>
    %cst_16 = arith.constant 2.000000e-01 : f32
    %21 = vector.broadcast %cst_16 : f32 to vector<128x128xf32>
    %22 = arith.mulf %21, %20 : vector<128x128xf32>
    %23 = arith.maximumf %20, %22 : vector<128x128xf32>
    %c0_17 = arith.constant 0 : index
    %c0_18 = arith.constant 0 : index
    %24 = vector.load %arg8[%c0_17, %c0_18] : memref<1x128xf32, #tpu.memory_space<vmem>>, vector<1x128xf32>
    "tpu.trace_start"() <{level = 10 : i32, message = "oh,mh->om"}> : () -> ()
    %cst_19 = arith.constant dense<0.000000e+00> : vector<1x128xf32>
    %25 = tpu.matmul %24, %23, %cst_19 {dimension_numbers = #tpu.dot_dimension_numbers<[1], [1], [0], [0], [0, 0, 1, 0], [], []>} : vector<1x128xf32>, vector<128x128xf32>, vector<1x128xf32> -> vector<1x128xf32>
    "tpu.trace_stop"() : () -> ()
    %c0_20 = arith.constant 0 : index
    %c0_21 = arith.constant 0 : index
    %26 = vector.load %arg9[%c0_20, %c0_21] : memref<1x1xf32, #tpu.memory_space<vmem>>, vector<1x1xf32>
    %27 = vector.broadcast %26 : vector<1x1xf32> to vector<1x128xf32>
    %28 = arith.addf %25, %27 : vector<1x128xf32>
    %29 = arith.negf %28 : vector<1x128xf32>
    %30 = math.exp %29 : vector<1x128xf32>
    %cst_22 = arith.constant 1.000000e+00 : f32
    %31 = vector.broadcast %cst_22 : f32 to vector<1x128xf32>
    %32 = arith.addf %31, %30 : vector<1x128xf32>
    %33 = arith.divf %31, %32 : vector<1x128xf32>
    %34 = vector.shape_cast %33 : vector<1x128xf32> to vector<1x1x128xf32>
    %c0_23 = arith.constant 0 : index
    %c0_24 = arith.constant 0 : index
    %c0_25 = arith.constant 0 : index
    %35 = vector.load %arg10[%c0_23, %c0_24, %c0_25] : memref<1x1x128xf32, #tpu.memory_space<vmem>>, vector<1x1x128xf32>
    tpu.vector_store %arg10[%c0_23, %c0_24, %c0_25], %34 {strides = array<i32>} : memref<1x1x128xf32, #tpu.memory_space<vmem>>, vector<1x1x128xf32>,
    return
  }
  func.func @transform_0(%arg0: i32) -> (i32, i32) {
    %c0_i32 = arith.constant 0 : i32
    %c0_i32_0 = arith.constant 0 : i32
    return %arg0, %c0_i32 : i32, i32
  }
  func.func @transform_1(%arg0: i32) -> (i32, i32) {
    %c0_i32 = arith.constant 0 : i32
    %c0_i32_0 = arith.constant 0 : i32
    %c0_i32_1 = arith.constant 0 : i32
    return %c0_i32, %c0_i32_0 : i32, i32
  }
  func.func @transform_2(%arg0: i32) -> (i32, i32) {
    %c0_i32 = arith.constant 0 : i32
    %c0_i32_0 = arith.constant 0 : i32
    %c0_i32_1 = arith.constant 0 : i32
    return %c0_i32, %c0_i32_0 : i32, i32
  }
  func.func @transform_3(%arg0: i32) -> (i32, i32) {
    %c0_i32 = arith.constant 0 : i32
    %c0_i32_0 = arith.constant 0 : i32
    %c0_i32_1 = arith.constant 0 : i32
    return %c0_i32, %c0_i32_0 : i32, i32
  }
  func.func @transform_4(%arg0: i32) -> (i32, i32) {
    %c0_i32 = arith.constant 0 : i32
    %c0_i32_0 = arith.constant 0 : i32
    %c0_i32_1 = arith.constant 0 : i32
    return %c0_i32, %c0_i32_0 : i32, i32
  }
  func.func @transform_5(%arg0: i32) -> (i32, i32) {
    %c0_i32 = arith.constant 0 : i32
    %c0_i32_0 = arith.constant 0 : i32
    %c0_i32_1 = arith.constant 0 : i32
    return %c0_i32, %c0_i32_0 : i32, i32
  }
  func.func @transform_6(%arg0: i32) -> (i32, i32) {
    %c0_i32 = arith.constant 0 : i32
    %c0_i32_0 = arith.constant 0 : i32
    %c0_i32_1 = arith.constant 0 : i32
    return %c0_i32, %c0_i32_0 : i32, i32
  }
  func.func @transform_7(%arg0: i32) -> (i32, i32) {
    %c0_i32 = arith.constant 0 : i32
    %c0_i32_0 = arith.constant 0 : i32
    %c0_i32_1 = arith.constant 0 : i32
    return %c0_i32, %c0_i32_0 : i32, i32
  }
  func.func @transform_8(%arg0: i32) -> (i32, i32) {
    %c0_i32 = arith.constant 0 : i32
    %c0_i32_0 = arith.constant 0 : i32
    %c0_i32_1 = arith.constant 0 : i32
    return %c0_i32, %c0_i32_0 : i32, i32
  }
  func.func @transform_9(%arg0: i32) -> (i32, i32, i32) {
    %c0_i32 = arith.constant 0 : i32
    %c0_i32_0 = arith.constant 0 : i32
    %c0_i32_1 = arith.constant 0 : i32
    return %arg0, %c0_i32, %c0_i32_0 : i32, i32, i32
  }
}

</mosaic_0001>

<llo_original>
// kernel: gan_forward.1
$region0: #{gan_forward.1}
  #allocation0 [shape = 'u32[]', space=smem, size = 0x4, offset = 0x4, fixed_abs, tag = 'smem constant byte address 0x4 - core index']
  #allocation1 [shape = 'u32[144,128]{1,0:T(1,128)}', space=vmem, size = 0x12000, scoped, tag = 'internal scratch']
  #allocation2 [shape = 'f32[1,1]{1,0:T(1,128)S(1)}', space=vmem, size = 0x200, scoped, tag = 'scoped memory for gan_forward.1']
  %s0 = inlined_call_operand.vmem [shape: bf16[256,128], index: 0, kind: input, shape index: {}]
  %s1 = inlined_call_operand.vmem [shape: bf16[128,128], index: 1, kind: input, shape index: {}]
  %s2 = inlined_call_operand.vmem [shape: f32[1,128], index: 2, kind: input, shape index: {}]
  %s3 = inlined_call_operand.vmem [shape: bf16[128,128], index: 3, kind: input, shape index: {}]
  %s4 = inlined_call_operand.vmem [shape: f32[1,128], index: 4, kind: input, shape index: {}]
  %s5 = inlined_call_operand.vmem [shape: bf16[128,128], index: 5, kind: input, shape index: {}]
  %s6 = inlined_call_operand.vmem [shape: f32[1,128], index: 6, kind: input, shape index: {}]
  %s7 = inlined_call_operand.vmem [shape: f32[1,128], index: 7, kind: input, shape index: {}]
  %s8 = inlined_call_operand.<no memory space> [shape: f32[1,1], index: 8, kind: input, shape index: {}]
  %s9 = inlined_call_operand.hbm [shape: f32[2,1,128], index: 9, kind: output, shape index: {}]
  %s10 = sld [smem:[#allocation0]]
  $region69: #{gan_forward.1} parent=0
    _
  %s12 = ssub.s32 1, %s10
  %s13 = scalar_select 0, %s12, %s10
  %v14 = vstv %s8
  %15 = vst [vmem:[#allocation2] sm:$0x1] %v14
  $region1: #{gan_forward.1} parent=0
    #allocation3 [shape = 'u8[1024]{0}', space=vmem, size = 0x400, scoped, tag = 'output window, operand 0']
    #allocation4 [shape = 's32[2]{0}', space=sflag, size = 0x8, scoped, tag = 'scoped memory for gan_forward.1']
    %16 = vsyncpa [#allocation4], 0
    %s17 = scalar_lea.sflag [#allocation4], 1
    %18 = vsyncpa %s17, 0
    loop: start=0, step=1, limit=4
    $region2: #{gan_forward.1} parent=1 // loop_pre_header
      _
    $region3: #{gan_forward.1} parent=1 // loop_header
      %s20 = sphi 0, %s24
      %p21 = scmp.ge.s32.totalorder %s20, 4
      %s30 = sphi 0, %s32
      %s33 = sphi 0, %s30
      %s34 = sphi 0, %s33
      %s50 = sphi 0, %s34
      %s54 = sphi 0, %s54
      %s56 = sphi 0, %s54
      %s57 = sphi 0, %s56
      %s71 = sphi 0, %s57
      %s75 = sphi 0, %s75
      %s77 = sphi 0, %s75
      %s78 = sphi 0, %s77
      %s92 = sphi 0, %s78
      %s96 = sphi 0, %s96
      %s98 = sphi 0, %s96
      %s99 = sphi 0, %s98
      %s113 = sphi 0, %s99
      %s117 = sphi 0, %s117
      %s119 = sphi 0, %s117
      %s120 = sphi 0, %s119
      %s134 = sphi 0, %s120
      %s138 = sphi 0, %s138
      %s140 = sphi 0, %s138
      %s141 = sphi 0, %s140
      %s155 = sphi 0, %s141
      %s159 = sphi 0, %s159
      %s161 = sphi 0, %s159
      %s162 = sphi 0, %s161
      %s176 = sphi 0, %s162
      %s180 = sphi 0, %s180
      %s182 = sphi 0, %s180
      %s183 = sphi 0, %s182
      %s197 = sphi 0, %s183
      %s201 = sphi 0, %s201
      %s203 = sphi 0, %s201
      %s204 = sphi 0, %s203
      %s218 = sphi 0, %s204
      %s224 = sphi 0, %s226
      %s227 = sphi 0, %s224
      %s228 = sphi 0, %s227
      %s244 = sphi 0, %s228
    $region4: #{gan_forward.1} parent=1 // loop_header_branch
      %23 = sbr.rel (%p21) target = $region8
    $region5: #{gan_forward.1} parent=1 // loop_body
      %s25 = ssub.s32 %s20, 1
      %s26 = ssub.s32 %s20, 2
      %s27 = sadd.s32 %s20, 1
      %s28 = ssub.s32 %s20, %s27
      %p29 = scmp.eq.s32.totalorder %s28, 0
      %s31 = sadd.s32 %s30, 1
      %s32 = scalar_select %p29, %s30, %s31
      %p35 = pneg %p29
      %p36 = scmp.eq.s32.totalorder %s20, 1
      %p37 = por %p35, %p36
      %p38 = scmp.ne.s32.totalorder %s30, %s33
      %p39 = scmp.eq.s32.totalorder %s20, 0
      %p40 = por %p38, %p39
      %p41 = scmp.ne.s32.totalorder %s30, %s33
      %p42 = scmp.eq.s32.totalorder %s25, 1
      %p43 = por %p41, %p42
      %p44 = scmp.ne.s32.totalorder %s33, %s34
      %p45 = scmp.eq.s32.totalorder %s25, 0
      %p46 = por %p44, %p45
      %p47 = scmp.ne.s32.totalorder %s33, %s34
      %p48 = scmp.eq.s32.totalorder %s26, 1
      %p49 = por %p47, %p48
      %p51 = scmp.ne.s32.totalorder %s34, %s50
      %p52 = scmp.eq.s32.totalorder %s26, 0
      %p53 = por %p51, %p52
      %s55 = sadd.s32 %s54, 1
      %p58 = scmp.eq.s32.totalorder %s20, 1
      %p59 = scmp.ne.s32.totalorder %s54, %s56
      %p60 = scmp.eq.s32.totalorder %s20, 0
      %p61 = por %p59, %p60
      %p62 = scmp.ne.s32.totalorder %s54, %s56
      %p63 = scmp.eq.s32.totalorder %s25, 1
      %p64 = por %p62, %p63
      %p65 = scmp.ne.s32.totalorder %s56, %s57
      %p66 = scmp.eq.s32.totalorder %s25, 0
      %p67 = por %p65, %p66
      %p68 = scmp.ne.s32.totalorder %s56, %s57
      %p69 = scmp.eq.s32.totalorder %s26, 1
      %p70 = por %p68, %p69
      %p72 = scmp.ne.s32.totalorder %s57, %s71
      %p73 = scmp.eq.s32.totalorder %s26, 0
      %p74 = por %p72, %p73
      %s76 = sadd.s32 %s75, 1
      %p79 = scmp.eq.s32.totalorder %s20, 1
      %p80 = scmp.ne.s32.totalorder %s75, %s77
      %p81 = scmp.eq.s32.totalorder %s20, 0
      %p82 = por %p80, %p81
      %p83 = scmp.ne.s32.totalorder %s75, %s77
      %p84 = scmp.eq.s32.totalorder %s25, 1
      %p85 = por %p83, %p84
      %p86 = scmp.ne.s32.totalorder %s77, %s78
      %p87 = scmp.eq.s32.totalorder %s25, 0
      %p88 = por %p86, %p87
      %p89 = scmp.ne.s32.totalorder %s77, %s78
      %p90 = scmp.eq.s32.totalorder %s26, 1
      %p91 = por %p89, %p90
      %p93 = scmp.ne.s32.totalorder %s78, %s92
      %p94 = scmp.eq.s32.totalorder %s26, 0
      %p95 = por %p93, %p94
      %s97 = sadd.s32 %s96, 1
      %p100 = scmp.eq.s32.totalorder %s20, 1
      %p101 = scmp.ne.s32.totalorder %s96, %s98
      %p102 = scmp.eq.s32.totalorder %s20, 0
      %p103 = por %p101, %p102
      %p104 = scmp.ne.s32.totalorder %s96, %s98
      %p105 = scmp.eq.s32.totalorder %s25, 1
      %p106 = por %p104, %p105
      %p107 = scmp.ne.s32.totalorder %s98, %s99
      %p108 = scmp.eq.s32.totalorder %s25, 0
      %p109 = por %p107, %p108
      %p110 = scmp.ne.s32.totalorder %s98, %s99
      %p111 = scmp.eq.s32.totalorder %s26, 1
      %p112 = por %p110, %p111
      %p114 = scmp.ne.s32.totalorder %s99, %s113
      %p115 = scmp.eq.s32.totalorder %s26, 0
      %p116 = por %p114, %p115
      %s118 = sadd.s32 %s117, 1
      %p121 = scmp.eq.s32.totalorder %s20, 1
      %p122 = scmp.ne.s32.totalorder %s117, %s119
      %p123 = scmp.eq.s32.totalorder %s20, 0
      %p124 = por %p122, %p123
      %p125 = scmp.ne.s32.totalorder %s117, %s119
      %p126 = scmp.eq.s32.totalorder %s25, 1
      %p127 = por %p125, %p126
      %p128 = scmp.ne.s32.totalorder %s119, %s120
      %p129 = scmp.eq.s32.totalorder %s25, 0
      %p130 = por %p128, %p129
      %p131 = scmp.ne.s32.totalorder %s119, %s120
      %p132 = scmp.eq.s32.totalorder %s26, 1
      %p133 = por %p131, %p132
      %p135 = scmp.ne.s32.totalorder %s120, %s134
      %p136 = scmp.eq.s32.totalorder %s26, 0
      %p137 = por %p135, %p136
      %s139 = sadd.s32 %s138, 1
      %p142 = scmp.eq.s32.totalorder %s20, 1
      %p143 = scmp.ne.s32.totalorder %s138, %s140
      %p144 = scmp.eq.s32.totalorder %s20, 0
      %p145 = por %p143, %p144
      %p146 = scmp.ne.s32.totalorder %s138, %s140
      %p147 = scmp.eq.s32.totalorder %s25, 1
      %p148 = por %p146, %p147
      %p149 = scmp.ne.s32.totalorder %s140, %s141
      %p150 = scmp.eq.s32.totalorder %s25, 0
      %p151 = por %p149, %p150
      %p152 = scmp.ne.s32.totalorder %s140, %s141
      %p153 = scmp.eq.s32.totalorder %s26, 1
      %p154 = por %p152, %p153
      %p156 = scmp.ne.s32.totalorder %s141, %s155
      %p157 = scmp.eq.s32.totalorder %s26, 0
      %p158 = por %p156, %p157
      %s160 = sadd.s32 %s159, 1
      %p163 = scmp.eq.s32.totalorder %s20, 1
      %p164 = scmp.ne.s32.totalorder %s159, %s161
      %p165 = scmp.eq.s32.totalorder %s20, 0
      %p166 = por %p164, %p165
      %p167 = scmp.ne.s32.totalorder %s159, %s161
      %p168 = scmp.eq.s32.totalorder %s25, 1
      %p169 = por %p167, %p168
      %p170 = scmp.ne.s32.totalorder %s161, %s162
      %p171 = scmp.eq.s32.totalorder %s25, 0
      %p172 = por %p170, %p171
      %p173 = scmp.ne.s32.totalorder %s161, %s162
      %p174 = scmp.eq.s32.totalorder %s26, 1
      %p175 = por %p173, %p174
      %p177 = scmp.ne.s32.totalorder %s162, %s176
      %p178 = scmp.eq.s32.totalorder %s26, 0
      %p179 = por %p177, %p178
      %s181 = sadd.s32 %s180, 1
      %p184 = scmp.eq.s32.totalorder %s20, 1
      %p185 = scmp.ne.s32.totalorder %s180, %s182
      %p186 = scmp.eq.s32.totalorder %s20, 0
      %p187 = por %p185, %p186
      %p188 = scmp.ne.s32.totalorder %s180, %s182
      %p189 = scmp.eq.s32.totalorder %s25, 1
      %p190 = por %p188, %p189
      %p191 = scmp.ne.s32.totalorder %s182, %s183
      %p192 = scmp.eq.s32.totalorder %s25, 0
      %p193 = por %p191, %p192
      %p194 = scmp.ne.s32.totalorder %s182, %s183
      %p195 = scmp.eq.s32.totalorder %s26, 1
      %p196 = por %p194, %p195
      %p198 = scmp.ne.s32.totalorder %s183, %s197
      %p199 = scmp.eq.s32.totalorder %s26, 0
      %p200 = por %p198, %p199
      %s202 = sadd.s32 %s201, 1
      %p205 = scmp.eq.s32.totalorder %s20, 1
      %p206 = scmp.ne.s32.totalorder %s201, %s203
      %p207 = scmp.eq.s32.totalorder %s20, 0
      %p208 = por %p206, %p207
      %p209 = scmp.ne.s32.totalorder %s201, %s203
      %p210 = scmp.eq.s32.totalorder %s25, 1
      %p211 = por %p209, %p210
      %p212 = scmp.ne.s32.totalorder %s203, %s204
      %p213 = scmp.eq.s32.totalorder %s25, 0
      %p214 = por %p212, %p213
      %p215 = scmp.ne.s32.totalorder %s203, %s204
      %p216 = scmp.eq.s32.totalorder %s26, 1
      %p217 = por %p215, %p216
      %p219 = scmp.ne.s32.totalorder %s204, %s218
      %p220 = scmp.eq.s32.totalorder %s26, 0
      %p221 = por %p219, %p220
      %s222 = ssub.s32 %s20, %s27
      %p223 = scmp.eq.s32.totalorder %s222, 0
      %s225 = sadd.s32 %s224, 1
      %s226 = scalar_select %p223, %s224, %s225
      %p229 = pneg %p223
      %p230 = scmp.eq.s32.totalorder %s20, 1
      %p231 = por %p229, %p230
      %p232 = scmp.ne.s32.totalorder %s224, %s227
      %p233 = scmp.eq.s32.totalorder %s20, 0
      %p234 = por %p232, %p233
      %p235 = scmp.ne.s32.totalorder %s224, %s227
      %p236 = scmp.eq.s32.totalorder %s25, 1
      %p237 = por %p235, %p236
      %p238 = scmp.ne.s32.totalorder %s227, %s228
      %p239 = scmp.eq.s32.totalorder %s25, 0
      %p240 = por %p238, %p239
      %p241 = scmp.ne.s32.totalorder %s227, %s228
      %p242 = scmp.eq.s32.totalorder %s26, 1
      %p243 = por %p241, %p242
      %p245 = scmp.ne.s32.totalorder %s228, %s244
      %p246 = scmp.eq.s32.totalorder %s26, 0
      %p247 = por %p245, %p246
      %p248 = scmp.le.s32.totalorder 1, %s20
      %p249 = scmp.lt.s32.totalorder %s20, 3
      %p250 = pnand %p248, %p249
      %p251 = pneg %p250
      // Predicated region
      $region9: #{gan_forward.1} parent=5 // pred_check
        _
      $region10: #{gan_forward.1} parent=5 // pred_check_branch
        %253 = sbr.rel (%p250) target = $region12
      $region11: #{gan_forward.1} parent=5 // pred_region
        %s254 = ssub.s32 %s20, 1
        // Predicated region
        $region13: #{gan_forward.1} parent=11 // pred_check
          %p255 = pneg %p67
        $region14: #{gan_forward.1} parent=11 // pred_check_branch
          %257 = sbr.rel (%p255) target = $region16
        $region15: #{gan_forward.1} parent=11 // pred_region
          _
        $region16: #{gan_forward.1} parent=11 // pred_fallthru
          _
        // Predicated region
        $region17: #{gan_forward.1} parent=11 // pred_check
          %p258 = pneg %p88
        $region18: #{gan_forward.1} parent=11 // pred_check_branch
          %260 = sbr.rel (%p258) target = $region20
        $region19: #{gan_forward.1} parent=11 // pred_region
          _
        $region20: #{gan_forward.1} parent=11 // pred_fallthru
          _
        // Predicated region
        $region21: #{gan_forward.1} parent=11 // pred_check
          %p261 = pneg %p109
        $region22: #{gan_forward.1} parent=11 // pred_check_branch
          %263 = sbr.rel (%p261) target = $region24
        $region23: #{gan_forward.1} parent=11 // pred_region
          _
        $region24: #{gan_forward.1} parent=11 // pred_fallthru
          _
        // Predicated region
        $region25: #{gan_forward.1} parent=11 // pred_check
          %p264 = pneg %p130
        $region26: #{gan_forward.1} parent=11 // pred_check_branch
          %266 = sbr.rel (%p264) target = $region28
        $region27: #{gan_forward.1} parent=11 // pred_region
          _
        $region28: #{gan_forward.1} parent=11 // pred_fallthru
          _
        // Predicated region
        $region29: #{gan_forward.1} parent=11 // pred_check
          %p267 = pneg %p151
        $region30: #{gan_forward.1} parent=11 // pred_check_branch
          %269 = sbr.rel (%p267) target = $region32
        $region31: #{gan_forward.1} parent=11 // pred_region
          _
        $region32: #{gan_forward.1} parent=11 // pred_fallthru
          _
        // Predicated region
        $region33: #{gan_forward.1} parent=11 // pred_check
          %p270 = pneg %p172
        $region34: #{gan_forward.1} parent=11 // pred_check_branch
          %272 = sbr.rel (%p270) target = $region36
        $region35: #{gan_forward.1} parent=11 // pred_region
          _
        $region36: #{gan_forward.1} parent=11 // pred_fallthru
          _
        // Predicated region
        $region37: #{gan_forward.1} parent=11 // pred_check
          %p273 = pneg %p193
        $region38: #{gan_forward.1} parent=11 // pred_check_branch
          %275 = sbr.rel (%p273) target = $region40
        $region39: #{gan_forward.1} parent=11 // pred_region
          _
        $region40: #{gan_forward.1} parent=11 // pred_fallthru
          _
        // Predicated region
        $region41: #{gan_forward.1} parent=11 // pred_check
          %p276 = pneg %p214
        $region42: #{gan_forward.1} parent=11 // pred_check_branch
          %278 = sbr.rel (%p276) target = $region44
        $region43: #{gan_forward.1} parent=11 // pred_region
          _
        $region44: #{gan_forward.1} parent=11 // pred_fallthru
          _
      $region12: #{gan_forward.1} parent=5 // pred_fallthru
        _
      %p279 = scmp.lt.s32.totalorder %s20, 2
      // Predicated region
      $region45: #{gan_forward.1} parent=5 // pred_check
        %p280 = pneg %p279
      $region46: #{gan_forward.1} parent=5 // pred_check_branch
        %282 = sbr.rel (%p280) target = $region48
      $region47: #{gan_forward.1} parent=5 // pred_region
        // Predicated region
        $region49: #{gan_forward.1} parent=47 // pred_check
          %p283 = pneg %p40
        $region50: #{gan_forward.1} parent=47 // pred_check_branch
          %285 = sbr.rel (%p283) target = $region52
        $region51: #{gan_forward.1} parent=47 // pred_region
          %s286 = smul.u32 16, %s20
          %p287 = scmp.lt.s32.totalorder %s286, 31
          %s288 = scalar_select %p287, %s286, 31
          %s289 = smul.addr %s288, 4
          %s290 = scalar_lea.vmem %s0, %s289
          %s291 = smul.u32 16, %s20
        $region52: #{gan_forward.1} parent=47 // pred_fallthru
          _
      $region48: #{gan_forward.1} parent=5 // pred_fallthru
        _
      %p292 = scmp.le.s32.totalorder 1, %s20
      %p293 = scmp.lt.s32.totalorder %s20, 3
      %p294 = pnand %p292, %p293
      %p295 = pneg %p294
      // Predicated region
      $region53: #{gan_forward.1} parent=5 // pred_check
        _
      $region54: #{gan_forward.1} parent=5 // pred_check_branch
        %297 = sbr.rel (%p294) target = $region56
      $region55: #{gan_forward.1} parent=5 // pred_region
        %s298 = ssub.s32 %s20, 1
        %s299 = smul.u32 16, %s25
        %p300 = scmp.lt.s32.totalorder %s299, 31
        %s301 = scalar_select %p300, %s299, 31
        %s302 = smul.addr %s301, 4
        %s303 = scalar_lea.vmem %s0, %s302
        %p304 = pneg %p46
        %p305 = pneg %p43
        %p306 = pneg %p67
        %p307 = pneg %p64
        %p308 = pneg %p88
        %p309 = pneg %p85
        %p310 = pneg %p109
        %p311 = pneg %p106
        %p312 = pneg %p130
        %p313 = pneg %p127
        %p314 = pneg %p151
        %p315 = pneg %p148
        %p316 = pneg %p172
        %p317 = pneg %p169
        %p318 = pneg %p193
        %p319 = pneg %p190
        %p320 = pneg %p214
        %p321 = pneg %p211
        %p322 = pneg %p240
        %p323 = pneg %p237
        %s324 = sand.u32 %s227, 1
        %s325 = scalar_lea.sflag [#allocation4], %s324
        %s326 = sand.u32 %s227, 1
        %s327 = scalar_lea.vmem [#allocation3], %s326
        %s328 = smul.u32 16, %s25
        %p329 = scmp.lt.s32.totalorder %s328, 31
        %s330 = scalar_select %p329, %s328, 31
        %s331 = smul.addr %s330, 4
        %s332 = scalar_lea.vmem %s0, %s331
        %s333 = smul.u32 16, %s25
        %v335 = vld [vmem:[%s332] sm:$0xf]
        %v336 = vld [vmem:[%s332 + $0x4] sm:$0xf]
        %v337 = vld [vmem:[%s332 + $0x8] sm:$0xf]
        %v338 = vld [vmem:[%s332 + $0xc] sm:$0xf]
        %v339 = vld [vmem:[%s332 + $0x10] sm:$0xf]
        %v340 = vld [vmem:[%s332 + $0x14] sm:$0xf]
        %v341 = vld [vmem:[%s332 + $0x18] sm:$0xf]
        %v342 = vld [vmem:[%s332 + $0x1c] sm:$0xf]
        %v343 = vld [vmem:[%s332 + $0x20] sm:$0xf]
        %v344 = vld [vmem:[%s332 + $0x24] sm:$0xf]
        %v345 = vld [vmem:[%s332 + $0x28] sm:$0xf]
        %v346 = vld [vmem:[%s332 + $0x2c] sm:$0xf]
        %v347 = vld [vmem:[%s332 + $0x30] sm:$0xf]
        %v348 = vld [vmem:[%s332 + $0x34] sm:$0xf]
        %v349 = vld [vmem:[%s332 + $0x38] sm:$0xf]
        %v350 = vld [vmem:[%s332 + $0x3c] sm:$0xf]
        %v351 = vld [vmem:[%s1] sm:$0xf]
        %v352 = vld [vmem:[%s1 + $0x4] sm:$0xf]
        %v353 = vld [vmem:[%s1 + $0x8] sm:$0xf]
        %v354 = vld [vmem:[%s1 + $0xc] sm:$0xf]
        %v355 = vld [vmem:[%s1 + $0x10] sm:$0xf]
        %v356 = vld [vmem:[%s1 + $0x14] sm:$0xf]
        %v357 = vld [vmem:[%s1 + $0x18] sm:$0xf]
        %v358 = vld [vmem:[%s1 + $0x1c] sm:$0xf]
        %v359 = vld [vmem:[%s1 + $0x20] sm:$0xf]
        %v360 = vld [vmem:[%s1 + $0x24] sm:$0xf]
        %v361 = vld [vmem:[%s1 + $0x28] sm:$0xf]
        %v362 = vld [vmem:[%s1 + $0x2c] sm:$0xf]
        %v363 = vld [vmem:[%s1 + $0x30] sm:$0xf]
        %v364 = vld [vmem:[%s1 + $0x34] sm:$0xf]
        %v365 = vld [vmem:[%s1 + $0x38] sm:$0xf]
        %v366 = vld [vmem:[%s1 + $0x3c] sm:$0xf]
        %v367 = vld [vmem:[%s2] sm:$0x1]
        %v369 = vlaneseq
        %v370 = vshrl.u32 %v369, 7
        %v371 = vsub.s32 0, %v370
        %v372 = vrot.slane %v367, %v371
        %v390 = vunpack.c.l.b16 %v335
        %v391 = vunpack.c.l.b16 %v336
        %v392 = vunpack.c.l.b16 %v337
        %v393 = vunpack.c.l.b16 %v338
        %v394 = vunpack.c.l.b16 %v339
        %v395 = vunpack.c.l.b16 %v340
        %v396 = vunpack.c.l.b16 %v341
        %v397 = vunpack.c.l.b16 %v342
        %v398 = vunpack.c.l.b16 %v343
        %v399 = vunpack.c.l.b16 %v344
        %v400 = vunpack.c.l.b16 %v345
        %v401 = vunpack.c.l.b16 %v346
        %v402 = vunpack.c.l.b16 %v347
        %v403 = vunpack.c.l.b16 %v348
        %v404 = vunpack.c.l.b16 %v349
        %v405 = vunpack.c.l.b16 %v350
        %v406 = vpack.c.b16 %v391, %v390
        %v407 = vpack.c.b16 %v393, %v392
        %v408 = vpack.c.b16 %v395, %v394
        %v409 = vpack.c.b16 %v397, %v396
        %v410 = vpack.c.b16 %v399, %v398
        %v411 = vpack.c.b16 %v401, %v400
        %v412 = vpack.c.b16 %v403, %v402
        %v413 = vpack.c.b16 %v405, %v404
        %v438 = vunpack.c.l.b16 %v351
        %v439 = vunpack.c.l.b16 %v352
        %v440 = vunpack.c.l.b16 %v353
        %v441 = vunpack.c.l.b16 %v354
        %v442 = vunpack.c.l.b16 %v355
        %v443 = vunpack.c.l.b16 %v356
        %v444 = vunpack.c.l.b16 %v357
        %v445 = vunpack.c.l.b16 %v358
        %v446 = vunpack.c.l.b16 %v359
        %v447 = vunpack.c.l.b16 %v360
        %v448 = vunpack.c.l.b16 %v361
        %v449 = vunpack.c.l.b16 %v362
        %v450 = vunpack.c.l.b16 %v363
        %v451 = vunpack.c.l.b16 %v364
        %v452 = vunpack.c.l.b16 %v365
        %v453 = vunpack.c.l.b16 %v366
        %v454 = vpack.c.b16 %v439, %v438
        %v455 = vpack.c.b16 %v441, %v440
        %v456 = vpack.c.b16 %v443, %v442
        %v457 = vpack.c.b16 %v445, %v444
        %v458 = vpack.c.b16 %v447, %v446
        %v459 = vpack.c.b16 %v449, %v448
        %v460 = vpack.c.b16 %v451, %v450
        %v461 = vpack.c.b16 %v453, %v452
        %470 = vmatprep.subr.bf16.mxu0 0
        %471 = vmatpush1.bf16.msra.mxu0 %v454
        %472 = vmatprep.subr.bf16.mxu0 0
        %473 = vmatpush1.bf16.msra.mxu0 %v455
        %474 = vmatprep.subr.bf16.mxu0 0
        %475 = vmatpush1.bf16.msra.mxu0 %v456
        %476 = vmatprep.subr.bf16.mxu0 0
        %477 = vmatpush1.bf16.msra.mxu0 %v457
        %478 = vmatprep.subr.bf16.mxu0 0
        %479 = vmatpush1.bf16.msra.mxu0 %v458
        %480 = vmatprep.subr.bf16.mxu0 0
        %481 = vmatpush1.bf16.msra.mxu0 %v459
        %482 = vmatprep.subr.bf16.mxu0 0
        %483 = vmatpush1.bf16.msra.mxu0 %v460
        %484 = vmatprep.subr.bf16.mxu0 0
        %485 = vmatpush1.bf16.msra.mxu0 %v461
        %486 = vmatprep.subr.bf16.mxu0 0
        %487 = vmatpush1.bf16.msra.mxu0 0
        %488 = vmatprep.subr.bf16.mxu0 0
        %489 = vmatpush1.bf16.msra.mxu0 0
        %490 = vmatprep.subr.bf16.mxu0 0
        %491 = vmatpush1.bf16.msra.mxu0 0
        %492 = vmatprep.subr.bf16.mxu0 0
        %493 = vmatpush1.bf16.msra.mxu0 0
        %494 = vmatprep.subr.bf16.mxu0 0
        %495 = vmatpush1.bf16.msra.mxu0 0
        %496 = vmatprep.subr.bf16.mxu0 0
        %497 = vmatpush1.bf16.msra.mxu0 0
        %498 = vmatprep.subr.bf16.mxu0 0
        %499 = vmatpush1.bf16.msra.mxu0 0
        %500 = vmatprep.subr.bf16.mxu0 0
        %501 = vmatpush1.bf16.msra.mxu0 0
        %502 = vmatprep.mubr.bf16.mxu0 0
        %503 = vmatmul.mubr.bf16.gmra.mrb[0].mxu0 %v406
        %v504 = vpop.f32.mrb[0].mxu0
        %v505 = vadd.f32 %v372, %v504
        %v506 = vpop.f32.mrb[0].mxu0
        %v507 = vpop.f32.mrb[0].mxu0
        %v508 = vadd.f32 %v372, %v507
        %v509 = vpop.f32.mrb[0].mxu0
        %510 = vmatprep.mubr.bf16.mxu0 0
        %511 = vmatmul.mubr.bf16.gmra.mrb[0].mxu0 %v407
        %v512 = vpop.f32.mrb[0].mxu0
        %v513 = vadd.f32 %v372, %v512
        %v514 = vpop.f32.mrb[0].mxu0
        %v515 = vpop.f32.mrb[0].mxu0
        %v516 = vadd.f32 %v372, %v515
        %v517 = vpop.f32.mrb[0].mxu0
        %518 = vmatprep.mubr.bf16.mxu0 0
        %519 = vmatmul.mubr.bf16.gmra.mrb[0].mxu0 %v408
        %v520 = vpop.f32.mrb[0].mxu0
        %v521 = vadd.f32 %v372, %v520
        %v522 = vpop.f32.mrb[0].mxu0
        %v523 = vpop.f32.mrb[0].mxu0
        %v524 = vadd.f32 %v372, %v523
        %v525 = vpop.f32.mrb[0].mxu0
        %526 = vmatprep.mubr.bf16.mxu0 0
        %527 = vmatmul.mubr.bf16.gmra.mrb[0].mxu0 %v409
        %v528 = vpop.f32.mrb[0].mxu0
        %v529 = vadd.f32 %v372, %v528
        %v530 = vpop.f32.mrb[0].mxu0
        %v531 = vpop.f32.mrb[0].mxu0
        %v532 = vadd.f32 %v372, %v531
        %v533 = vpop.f32.mrb[0].mxu0
        %534 = vmatprep.mubr.bf16.mxu0 0
        %535 = vmatmul.mubr.bf16.gmra.mrb[0].mxu0 %v410
        %v536 = vpop.f32.mrb[0].mxu0
        %v537 = vadd.f32 %v372, %v536
        %v538 = vpop.f32.mrb[0].mxu0
        %v539 = vpop.f32.mrb[0].mxu0
        %v540 = vadd.f32 %v372, %v539
        %v541 = vpop.f32.mrb[0].mxu0
        %542 = vmatprep.mubr.bf16.mxu0 0
        %543 = vmatmul.mubr.bf16.gmra.mrb[0].mxu0 %v411
        %v544 = vpop.f32.mrb[0].mxu0
        %v545 = vadd.f32 %v372, %v544
        %v546 = vpop.f32.mrb[0].mxu0
        %v547 = vpop.f32.mrb[0].mxu0
        %v548 = vadd.f32 %v372, %v547
        %v549 = vpop.f32.mrb[0].mxu0
        %550 = vmatprep.mubr.bf16.mxu0 0
        %551 = vmatmul.mubr.bf16.gmra.mrb[0].mxu0 %v412
        %v552 = vpop.f32.mrb[0].mxu0
        %v553 = vadd.f32 %v372, %v552
        %v554 = vpop.f32.mrb[0].mxu0
        %v555 = vpop.f32.mrb[0].mxu0
        %v556 = vadd.f32 %v372, %v555
        %v557 = vpop.f32.mrb[0].mxu0
        %558 = vmatprep.mubr.bf16.mxu0 0
        %559 = vmatmul.mubr.bf16.gmra.mrb[0].mxu0 %v413
        %v560 = vpop.f32.mrb[0].mxu0
        %v561 = vadd.f32 %v372, %v560
        %v562 = vpop.f32.mrb[0].mxu0
        %v563 = vpop.f32.mrb[0].mxu0
        %v564 = vadd.f32 %v372, %v563
        %v565 = vpop.f32.mrb[0].mxu0
        %566 = vdwg.mxu0
        %v567 = vmax.f32 %v505, 0.0
        %v568 = vmax.f32 %v508, 0.0
        %v569 = vmax.f32 %v513, 0.0
        %v570 = vmax.f32 %v516, 0.0
        %v571 = vmax.f32 %v521, 0.0
        %v572 = vmax.f32 %v524, 0.0
        %v573 = vmax.f32 %v529, 0.0
        %v574 = vmax.f32 %v532, 0.0
        %v575 = vmax.f32 %v537, 0.0
        %v576 = vmax.f32 %v540, 0.0
        %v577 = vmax.f32 %v545, 0.0
        %v578 = vmax.f32 %v548, 0.0
        %v579 = vmax.f32 %v553, 0.0
        %v580 = vmax.f32 %v556, 0.0
        %v581 = vmax.f32 %v561, 0.0
        %v582 = vmax.f32 %v564, 0.0
        %v583 = vpack.c.bf16 %v568, %v567
        %v584 = vpack.c.bf16 %v570, %v569
        %v585 = vpack.c.bf16 %v572, %v571
        %v586 = vpack.c.bf16 %v574, %v573
        %v587 = vpack.c.bf16 %v576, %v575
        %v588 = vpack.c.bf16 %v578, %v577
        %v589 = vpack.c.bf16 %v580, %v579
        %v590 = vpack.c.bf16 %v582, %v581
        %v591 = vld [vmem:[%s3] sm:$0xf]
        %v592 = vld [vmem:[%s3 + $0x4] sm:$0xf]
        %v593 = vld [vmem:[%s3 + $0x8] sm:$0xf]
        %v594 = vld [vmem:[%s3 + $0xc] sm:$0xf]
        %v595 = vld [vmem:[%s3 + $0x10] sm:$0xf]
        %v596 = vld [vmem:[%s3 + $0x14] sm:$0xf]
        %v597 = vld [vmem:[%s3 + $0x18] sm:$0xf]
        %v598 = vld [vmem:[%s3 + $0x1c] sm:$0xf]
        %v599 = vld [vmem:[%s3 + $0x20] sm:$0xf]
        %v600 = vld [vmem:[%s3 + $0x24] sm:$0xf]
        %v601 = vld [vmem:[%s3 + $0x28] sm:$0xf]
        %v602 = vld [vmem:[%s3 + $0x2c] sm:$0xf]
        %v603 = vld [vmem:[%s3 + $0x30] sm:$0xf]
        %v604 = vld [vmem:[%s3 + $0x34] sm:$0xf]
        %v605 = vld [vmem:[%s3 + $0x38] sm:$0xf]
        %v606 = vld [vmem:[%s3 + $0x3c] sm:$0xf]
        %v607 = vld [vmem:[%s4] sm:$0x1]
        %v609 = vlaneseq
        %v610 = vshrl.u32 %v609, 7
        %v611 = vsub.s32 0, %v610
        %v612 = vrot.slane %v607, %v611
        %v630 = vunpack.c.l.b16 %v591
        %v631 = vunpack.c.l.b16 %v592
        %v632 = vunpack.c.l.b16 %v593
        %v633 = vunpack.c.l.b16 %v594
        %v634 = vunpack.c.l.b16 %v595
        %v635 = vunpack.c.l.b16 %v596
        %v636 = vunpack.c.l.b16 %v597
        %v637 = vunpack.c.l.b16 %v598
        %v638 = vunpack.c.l.b16 %v599
        %v639 = vunpack.c.l.b16 %v600
        %v640 = vunpack.c.l.b16 %v601
        %v641 = vunpack.c.l.b16 %v602
        %v642 = vunpack.c.l.b16 %v603
        %v643 = vunpack.c.l.b16 %v604
        %v644 = vunpack.c.l.b16 %v605
        %v645 = vunpack.c.l.b16 %v606
        %v646 = vpack.c.b16 %v631, %v630
        %v647 = vpack.c.b16 %v633, %v632
        %v648 = vpack.c.b16 %v635, %v634
        %v649 = vpack.c.b16 %v637, %v636
        %v650 = vpack.c.b16 %v639, %v638
        %v651 = vpack.c.b16 %v641, %v640
        %v652 = vpack.c.b16 %v643, %v642
        %v653 = vpack.c.b16 %v645, %v644
        %662 = vmatprep.subr.bf16.mxu0 0
        %663 = vmatpush1.bf16.msra.mxu0 %v646
        %664 = vmatprep.subr.bf16.mxu0 0
        %665 = vmatpush1.bf16.msra.mxu0 %v647
        %666 = vmatprep.subr.bf16.mxu0 0
        %667 = vmatpush1.bf16.msra.mxu0 %v648
        %668 = vmatprep.subr.bf16.mxu0 0
        %669 = vmatpush1.bf16.msra.mxu0 %v649
        %670 = vmatprep.subr.bf16.mxu0 0
        %671 = vmatpush1.bf16.msra.mxu0 %v650
        %672 = vmatprep.subr.bf16.mxu0 0
        %673 = vmatpush1.bf16.msra.mxu0 %v651
        %674 = vmatprep.subr.bf16.mxu0 0
        %675 = vmatpush1.bf16.msra.mxu0 %v652
        %676 = vmatprep.subr.bf16.mxu0 0
        %677 = vmatpush1.bf16.msra.mxu0 %v653
        %678 = vmatprep.subr.bf16.mxu0 0
        %679 = vmatpush1.bf16.msra.mxu0 0
        %680 = vmatprep.subr.bf16.mxu0 0
        %681 = vmatpush1.bf16.msra.mxu0 0
        %682 = vmatprep.subr.bf16.mxu0 0
        %683 = vmatpush1.bf16.msra.mxu0 0
        %684 = vmatprep.subr.bf16.mxu0 0
        %685 = vmatpush1.bf16.msra.mxu0 0
        %686 = vmatprep.subr.bf16.mxu0 0
        %687 = vmatpush1.bf16.msra.mxu0 0
        %688 = vmatprep.subr.bf16.mxu0 0
        %689 = vmatpush1.bf16.msra.mxu0 0
        %690 = vmatprep.subr.bf16.mxu0 0
        %691 = vmatpush1.bf16.msra.mxu0 0
        %692 = vmatprep.subr.bf16.mxu0 0
        %693 = vmatpush1.bf16.msra.mxu0 0
        %694 = vmatprep.mubr.bf16.mxu0 0
        %695 = vmatmul.mubr.bf16.gmra.mrb[0].mxu0 %v583
        %v696 = vpop.f32.mrb[0].mxu0
        %v697 = vadd.f32 %v612, %v696
        %v698 = vpop.f32.mrb[0].mxu0
        %v699 = vpop.f32.mrb[0].mxu0
        %v700 = vadd.f32 %v612, %v699
        %v701 = vpop.f32.mrb[0].mxu0
        %702 = vmatprep.mubr.bf16.mxu0 0
        %703 = vmatmul.mubr.bf16.gmra.mrb[0].mxu0 %v584
        %v704 = vpop.f32.mrb[0].mxu0
        %v705 = vadd.f32 %v612, %v704
        %v706 = vpop.f32.mrb[0].mxu0
        %v707 = vpop.f32.mrb[0].mxu0
        %v708 = vadd.f32 %v612, %v707
        %v709 = vpop.f32.mrb[0].mxu0
        %710 = vmatprep.mubr.bf16.mxu0 0
        %711 = vmatmul.mubr.bf16.gmra.mrb[0].mxu0 %v585
        %v712 = vpop.f32.mrb[0].mxu0
        %v713 = vadd.f32 %v612, %v712
        %v714 = vpop.f32.mrb[0].mxu0
        %v715 = vpop.f32.mrb[0].mxu0
        %v716 = vadd.f32 %v612, %v715
        %v717 = vpop.f32.mrb[0].mxu0
        %718 = vmatprep.mubr.bf16.mxu0 0
        %719 = vmatmul.mubr.bf16.gmra.mrb[0].mxu0 %v586
        %v720 = vpop.f32.mrb[0].mxu0
        %v721 = vadd.f32 %v612, %v720
        %v722 = vpop.f32.mrb[0].mxu0
        %v723 = vpop.f32.mrb[0].mxu0
        %v724 = vadd.f32 %v612, %v723
        %v725 = vpop.f32.mrb[0].mxu0
        %726 = vmatprep.mubr.bf16.mxu0 0
        %727 = vmatmul.mubr.bf16.gmra.mrb[0].mxu0 %v587
        %v728 = vpop.f32.mrb[0].mxu0
        %v729 = vadd.f32 %v612, %v728
        %v730 = vpop.f32.mrb[0].mxu0
        %v731 = vpop.f32.mrb[0].mxu0
        %v732 = vadd.f32 %v612, %v731
        %v733 = vpop.f32.mrb[0].mxu0
        %734 = vmatprep.mubr.bf16.mxu0 0
        %735 = vmatmul.mubr.bf16.gmra.mrb[0].mxu0 %v588
        %v736 = vpop.f32.mrb[0].mxu0
        %v737 = vadd.f32 %v612, %v736
        %v738 = vpop.f32.mrb[0].mxu0
        %v739 = vpop.f32.mrb[0].mxu0
        %v740 = vadd.f32 %v612, %v739
        %v741 = vpop.f32.mrb[0].mxu0
        %742 = vmatprep.mubr.bf16.mxu0 0
        %743 = vmatmul.mubr.bf16.gmra.mrb[0].mxu0 %v589
        %v744 = vpop.f32.mrb[0].mxu0
        %v745 = vadd.f32 %v612, %v744
        %v746 = vpop.f32.mrb[0].mxu0
        %v747 = vpop.f32.mrb[0].mxu0
        %v748 = vadd.f32 %v612, %v747
        %v749 = vpop.f32.mrb[0].mxu0
        %750 = vmatprep.mubr.bf16.mxu0 0
        %751 = vmatmul.mubr.bf16.gmra.mrb[0].mxu0 %v590
        %v752 = vpop.f32.mrb[0].mxu0
        %v753 = vadd.f32 %v612, %v752
        %v754 = vpop.f32.mrb[0].mxu0
        %v755 = vpop.f32.mrb[0].mxu0
        %v756 = vadd.f32 %v612, %v755
        %v757 = vpop.f32.mrb[0].mxu0
        %758 = vdwg.mxu0
        %v759 = vtanh.pop %v697
        %v760 = vtanh.pop %v700
        %v761 = vtanh.pop %v705
        %v762 = vtanh.pop %v708
        %v763 = vtanh.pop %v713
        %v764 = vtanh.pop %v716
        %v765 = vtanh.pop %v721
        %v766 = vtanh.pop %v724
        %v767 = vtanh.pop %v729
        %v768 = vtanh.pop %v732
        %v769 = vtanh.pop %v737
        %v770 = vtanh.pop %v740
        %v771 = vtanh.pop %v745
        %v772 = vtanh.pop %v748
        %v773 = vtanh.pop %v753
        %v774 = vtanh.pop %v756
        %v775 = vpack.c.bf16 %v760, %v759
        %v776 = vpack.c.bf16 %v762, %v761
        %v777 = vpack.c.bf16 %v764, %v763
        %v778 = vpack.c.bf16 %v766, %v765
        %v779 = vpack.c.bf16 %v768, %v767
        %v780 = vpack.c.bf16 %v770, %v769
        %v781 = vpack.c.bf16 %v772, %v771
        %v782 = vpack.c.bf16 %v774, %v773
        %v783 = vld [vmem:[%s5] sm:$0xf]
        %v784 = vld [vmem:[%s5 + $0x4] sm:$0xf]
        %v785 = vld [vmem:[%s5 + $0x8] sm:$0xf]
        %v786 = vld [vmem:[%s5 + $0xc] sm:$0xf]
        %v787 = vld [vmem:[%s5 + $0x10] sm:$0xf]
        %v788 = vld [vmem:[%s5 + $0x14] sm:$0xf]
        %v789 = vld [vmem:[%s5 + $0x18] sm:$0xf]
        %v790 = vld [vmem:[%s5 + $0x1c] sm:$0xf]
        %v791 = vld [vmem:[%s5 + $0x20] sm:$0xf]
        %v792 = vld [vmem:[%s5 + $0x24] sm:$0xf]
        %v793 = vld [vmem:[%s5 + $0x28] sm:$0xf]
        %v794 = vld [vmem:[%s5 + $0x2c] sm:$0xf]
        %v795 = vld [vmem:[%s5 + $0x30] sm:$0xf]
        %v796 = vld [vmem:[%s5 + $0x34] sm:$0xf]
        %v797 = vld [vmem:[%s5 + $0x38] sm:$0xf]
        %v798 = vld [vmem:[%s5 + $0x3c] sm:$0xf]
        %v799 = vld [vmem:[%s6] sm:$0x1]
        %v801 = vlaneseq
        %v802 = vshrl.u32 %v801, 7
        %v803 = vsub.s32 0, %v802
        %v804 = vrot.slane %v799, %v803
        %v822 = vunpack.c.l.b16 %v783
        %v823 = vunpack.c.l.b16 %v784
        %v824 = vunpack.c.l.b16 %v785
        %v825 = vunpack.c.l.b16 %v786
        %v826 = vunpack.c.l.b16 %v787
        %v827 = vunpack.c.l.b16 %v788
        %v828 = vunpack.c.l.b16 %v789
        %v829 = vunpack.c.l.b16 %v790
        %v830 = vunpack.c.l.b16 %v791
        %v831 = vunpack.c.l.b16 %v792
        %v832 = vunpack.c.l.b16 %v793
        %v833 = vunpack.c.l.b16 %v794
        %v834 = vunpack.c.l.b16 %v795
        %v835 = vunpack.c.l.b16 %v796
        %v836 = vunpack.c.l.b16 %v797
        %v837 = vunpack.c.l.b16 %v798
        %v838 = vpack.c.b16 %v823, %v822
        %v839 = vpack.c.b16 %v825, %v824
        %v840 = vpack.c.b16 %v827, %v826
        %v841 = vpack.c.b16 %v829, %v828
        %v842 = vpack.c.b16 %v831, %v830
        %v843 = vpack.c.b16 %v833, %v832
        %v844 = vpack.c.b16 %v835, %v834
        %v845 = vpack.c.b16 %v837, %v836
        %854 = vmatprep.subr.bf16.mxu0 0
        %855 = vmatpush1.bf16.msra.mxu0 %v838
        %856 = vmatprep.subr.bf16.mxu0 0
        %857 = vmatpush1.bf16.msra.mxu0 %v839
        %858 = vmatprep.subr.bf16.mxu0 0
        %859 = vmatpush1.bf16.msra.mxu0 %v840
        %860 = vmatprep.subr.bf16.mxu0 0
        %861 = vmatpush1.bf16.msra.mxu0 %v841
        %862 = vmatprep.subr.bf16.mxu0 0
        %863 = vmatpush1.bf16.msra.mxu0 %v842
        %864 = vmatprep.subr.bf16.mxu0 0
        %865 = vmatpush1.bf16.msra.mxu0 %v843
        %866 = vmatprep.subr.bf16.mxu0 0
        %867 = vmatpush1.bf16.msra.mxu0 %v844
        %868 = vmatprep.subr.bf16.mxu0 0
        %869 = vmatpush1.bf16.msra.mxu0 %v845
        %870 = vmatprep.subr.bf16.mxu0 0
        %871 = vmatpush1.bf16.msra.mxu0 0
        %872 = vmatprep.subr.bf16.mxu0 0
        %873 = vmatpush1.bf16.msra.mxu0 0
        %874 = vmatprep.subr.bf16.mxu0 0
        %875 = vmatpush1.bf16.msra.mxu0 0
        %876 = vmatprep.subr.bf16.mxu0 0
        %877 = vmatpush1.bf16.msra.mxu0 0
        %878 = vmatprep.subr.bf16.mxu0 0
        %879 = vmatpush1.bf16.msra.mxu0 0
        %880 = vmatprep.subr.bf16.mxu0 0
        %881 = vmatpush1.bf16.msra.mxu0 0
        %882 = vmatprep.subr.bf16.mxu0 0
        %883 = vmatpush1.bf16.msra.mxu0 0
        %884 = vmatprep.subr.bf16.mxu0 0
        %885 = vmatpush1.bf16.msra.mxu0 0
        %886 = vmatprep.mubr.bf16.mxu0 0
        %887 = vmatmul.mubr.bf16.gmra.mrb[0].mxu0 %v775
        %v888 = vpop.f32.mrb[0].mxu0
        %v889 = vadd.f32 %v804, %v888
        %v890 = vpop.f32.mrb[0].mxu0
        %v891 = vpop.f32.mrb[0].mxu0
        %v892 = vadd.f32 %v804, %v891
        %v893 = vpop.f32.mrb[0].mxu0
        %894 = vmatprep.mubr.bf16.mxu0 0
        %895 = vmatmul.mubr.bf16.gmra.mrb[0].mxu0 %v776
        %v896 = vpop.f32.mrb[0].mxu0
        %v897 = vadd.f32 %v804, %v896
        %v898 = vpop.f32.mrb[0].mxu0
        %v899 = vpop.f32.mrb[0].mxu0
        %v900 = vadd.f32 %v804, %v899
        %v901 = vpop.f32.mrb[0].mxu0
        %902 = vmatprep.mubr.bf16.mxu0 0
        %903 = vmatmul.mubr.bf16.gmra.mrb[0].mxu0 %v777
        %v904 = vpop.f32.mrb[0].mxu0
        %v905 = vadd.f32 %v804, %v904
        %v906 = vpop.f32.mrb[0].mxu0
        %v907 = vpop.f32.mrb[0].mxu0
        %v908 = vadd.f32 %v804, %v907
        %v909 = vpop.f32.mrb[0].mxu0
        %910 = vmatprep.mubr.bf16.mxu0 0
        %911 = vmatmul.mubr.bf16.gmra.mrb[0].mxu0 %v778
        %v912 = vpop.f32.mrb[0].mxu0
        %v913 = vadd.f32 %v804, %v912
        %v914 = vpop.f32.mrb[0].mxu0
        %v915 = vpop.f32.mrb[0].mxu0
        %v916 = vadd.f32 %v804, %v915
        %v917 = vpop.f32.mrb[0].mxu0
        %918 = vmatprep.mubr.bf16.mxu0 0
        %919 = vmatmul.mubr.bf16.gmra.mrb[0].mxu0 %v779
        %v920 = vpop.f32.mrb[0].mxu0
        %v921 = vadd.f32 %v804, %v920
        %v922 = vpop.f32.mrb[0].mxu0
        %v923 = vpop.f32.mrb[0].mxu0
        %v924 = vadd.f32 %v804, %v923
        %v925 = vpop.f32.mrb[0].mxu0
        %926 = vmatprep.mubr.bf16.mxu0 0
        %927 = vmatmul.mubr.bf16.gmra.mrb[0].mxu0 %v780
        %v928 = vpop.f32.mrb[0].mxu0
        %v929 = vadd.f32 %v804, %v928
        %v930 = vpop.f32.mrb[0].mxu0
        %v931 = vpop.f32.mrb[0].mxu0
        %v932 = vadd.f32 %v804, %v931
        %v933 = vpop.f32.mrb[0].mxu0
        %934 = vmatprep.mubr.bf16.mxu0 0
        %935 = vmatmul.mubr.bf16.gmra.mrb[0].mxu0 %v781
        %v936 = vpop.f32.mrb[0].mxu0
        %v937 = vadd.f32 %v804, %v936
        %v938 = vpop.f32.mrb[0].mxu0
        %v939 = vpop.f32.mrb[0].mxu0
        %v940 = vadd.f32 %v804, %v939
        %v941 = vpop.f32.mrb[0].mxu0
        %942 = vmatprep.mubr.bf16.mxu0 0
        %943 = vmatmul.mubr.bf16.gmra.mrb[0].mxu0 %v782
        %v944 = vpop.f32.mrb[0].mxu0
        %v945 = vadd.f32 %v804, %v944
        %v946 = vpop.f32.mrb[0].mxu0
        %v947 = vpop.f32.mrb[0].mxu0
        %v948 = vadd.f32 %v804, %v947
        %v949 = vpop.f32.mrb[0].mxu0
        %950 = vdwg.mxu0
        %v951 = vmul.f32 %v889, 0.2
        %v952 = vmul.f32 %v892, 0.2
        %v953 = vmul.f32 %v897, 0.2
        %v954 = vmul.f32 %v900, 0.2
        %v955 = vmul.f32 %v905, 0.2
        %v956 = vmul.f32 %v908, 0.2
        %v957 = vmul.f32 %v913, 0.2
        %v958 = vmul.f32 %v916, 0.2
        %v959 = vmul.f32 %v921, 0.2
        %v960 = vmul.f32 %v924, 0.2
        %v961 = vmul.f32 %v929, 0.2
        %v962 = vmul.f32 %v932, 0.2
        %v963 = vmul.f32 %v937, 0.2
        %v964 = vmul.f32 %v940, 0.2
        %v965 = vmul.f32 %v945, 0.2
        %v966 = vmul.f32 %v948, 0.2
        %v967 = vmax.f32 %v889, %v951
        %v968 = vmax.f32 %v892, %v952
        %v969 = vmax.f32 %v897, %v953
        %v970 = vmax.f32 %v900, %v954
        %v971 = vmax.f32 %v905, %v955
        %v972 = vmax.f32 %v908, %v956
        %v973 = vmax.f32 %v913, %v957
        %v974 = vmax.f32 %v916, %v958
        %v975 = vmax.f32 %v921, %v959
        %v976 = vmax.f32 %v924, %v960
        %v977 = vmax.f32 %v929, %v961
        %v978 = vmax.f32 %v932, %v962
        %v979 = vmax.f32 %v937, %v963
        %v980 = vmax.f32 %v940, %v964
        %v981 = vmax.f32 %v945, %v965
        %v982 = vmax.f32 %v948, %v966
        %v983 = vld [vmem:[%s7] sm:$0x1]
        %v984 = vld [vmem:[#allocation2] sm:$0x1]
        %986 = vset.pattern.permute.xlu0 0
        %987 = vperm.xlu0 %986, %v984
        %v988 = vpop.permute.xlu0 %987
        %v990 = vlaneseq
        %v991 = vshrl.u32 %v990, 7
        %v992 = vsub.s32 0, %v991
        %v993 = vrot.slane %v988, %v992
        %994 = vmatprep.subr.mxu0 0.0
        %995 = vmatpush1.xpose.msra.mxu0 %v967
        %996 = vmatprep.subr.mxu0 0.0
        %997 = vmatpush1.xpose.msra.mxu0 %v968
        %998 = vmatprep.subr.mxu0 0.0
        %999 = vmatpush1.xpose.msra.mxu0 %v969
        %1000 = vmatprep.subr.mxu0 0.0
        %1001 = vmatpush1.xpose.msra.mxu0 %v970
        %1002 = vmatprep.subr.mxu0 0.0
        %1003 = vmatpush1.xpose.msra.mxu0 %v971
        %1004 = vmatprep.subr.mxu0 0.0
        %1005 = vmatpush1.xpose.msra.mxu0 %v972
        %1006 = vmatprep.subr.mxu0 0.0
        %1007 = vmatpush1.xpose.msra.mxu0 %v973
        %1008 = vmatprep.subr.mxu0 0.0
        %1009 = vmatpush1.xpose.msra.mxu0 %v974
        %1010 = vmatprep.subr.mxu0 0.0
        %1011 = vmatpush1.xpose.msra.mxu0 %v975
        %1012 = vmatprep.subr.mxu0 0.0
        %1013 = vmatpush1.xpose.msra.mxu0 %v976
        %1014 = vmatprep.subr.mxu0 0.0
        %1015 = vmatpush1.xpose.msra.mxu0 %v977
        %1016 = vmatprep.subr.mxu0 0.0
        %1017 = vmatpush1.xpose.msra.mxu0 %v978
        %1018 = vmatprep.subr.mxu0 0.0
        %1019 = vmatpush1.xpose.msra.mxu0 %v979
        %1020 = vmatprep.subr.mxu0 0.0
        %1021 = vmatpush1.xpose.msra.mxu0 %v980
        %1022 = vmatprep.subr.mxu0 0.0
        %1023 = vmatpush1.xpose.msra.mxu0 %v981
        %1024 = vmatprep.subr.mxu0 0.0
        %1025 = vmatpush1.xpose.msra.mxu0 %v982
        %1026 = vmatprep.subr.mxu0 0.0
        %1027 = vmatpush1.xpose.msra.mxu0 0.0
        %1028 = vmatprep.subr.mxu0 0.0
        %1029 = vmatpush1.xpose.msra.mxu0 0.0
        %1030 = vmatprep.subr.mxu0 0.0
        %1031 = vmatpush1.xpose.msra.mxu0 0.0
        %1032 = vmatprep.subr.mxu0 0.0
        %1033 = vmatpush1.xpose.msra.mxu0 0.0
        %1034 = vmatprep.subr.mxu0 0.0
        %1035 = vmatpush1.xpose.msra.mxu0 0.0
        %1036 = vmatprep.subr.mxu0 0.0
        %1037 = vmatpush1.xpose.msra.mxu0 0.0
        %1038 = vmatprep.subr.mxu0 0.0
        %1039 = vmatpush1.xpose.msra.mxu0 0.0
        %1040 = vmatprep.subr.mxu0 0.0
        %1041 = vmatpush1.xpose.msra.mxu0 0.0
        %1042 = vmatprep.subr.mxu0 0.0
        %1043 = vmatpush1.xpose.msra.mxu0 0.0
        %1044 = vmatprep.subr.mxu0 0.0
        %1045 = vmatpush1.xpose.msra.mxu0 0.0
        %1046 = vmatprep.subr.mxu0 0.0
        %1047 = vmatpush1.xpose.msra.mxu0 0.0
        %1048 = vmatprep.subr.mxu0 0.0
        %1049 = vmatpush1.xpose.msra.mxu0 0.0
        %1050 = vmatprep.subr.mxu0 0.0
        %1051 = vmatpush1.xpose.msra.mxu0 0.0
        %1052 = vmatprep.subr.mxu0 0.0
        %1053 = vmatpush1.xpose.msra.mxu0 0.0
        %1054 = vmatprep.subr.mxu0 0.0
        %1055 = vmatpush1.xpose.msra.mxu0 0.0
        %1056 = vmatprep.subr.mxu0 0.0
        %1057 = vmatpush1.xpose.msra.mxu0 0.0
        %1058 = vmatprep.mubr.f32.mxu0 0.0
        %1059 = vmatmul.mubr.f32.gmra.mrb[0].mxu0 %v983
        %v1060 = vpop.f32.mrb[0].mxu0
        %v1061 = vadd.f32 %v993, %v1060
        %v1062 = vpop.f32.mrb[0].mxu0
        %1063 = vdwg.mxu0
        %v1064 = vxor.u32 %v1061, 2147483648
        %v1065 = vmul.f32 %v1064, 1.442695
        %v1066 = vpow.pop %v1065
        %v1067 = vadd.f32 %v1066, 1.0
        %v1068 = vrcp.pop %v1067
        %v1069 = vmul.f32 1.0, %v1068
        %1070 = vst [vmem:[%s327] sm:$0x1] %v1069
        %s1071 = sand.u32 %s227, 1
        %s1072 = scalar_lea.sflag [#allocation4], %s1071
        %s1073 = sand.u32 %s227, 1
        %s1074 = scalar_lea.vmem [#allocation3], %s1073
        // Predicated region
        $region57: #{gan_forward.1} parent=55 // pred_check
          %p1075 = pneg %p237
        $region58: #{gan_forward.1} parent=55 // pred_check_branch
          %1077 = sbr.rel (%p1075) target = $region60
        $region59: #{gan_forward.1} parent=55 // pred_region
          %s1079 = ssub.s32 16, 16
          %1080 = vsyncadd %s1072, %s1079
          %s1081 = smul.addr %s25, 16
          %s1082 = scalar_lea.hbm %s9, %s1081
          %s1084 = sshll.u32 %s1074, 4
          %s1085 = int_to_ptr.vmem [resolvable:$true] %s1084
          %1087 = dma.vmem_to_hbm [thread:$0]  %s1085, 16, %s1082, %s1072
        $region60: #{gan_forward.1} parent=55 // pred_fallthru
          _
      $region56: #{gan_forward.1} parent=5 // pred_fallthru
        _
      %p1088 = scmp.le.s32.totalorder 2, %s20
      // Predicated region
      $region61: #{gan_forward.1} parent=5 // pred_check
        %p1089 = pneg %p1088
      $region62: #{gan_forward.1} parent=5 // pred_check_branch
        %1091 = sbr.rel (%p1089) target = $region64
      $region63: #{gan_forward.1} parent=5 // pred_region
        %s1092 = ssub.s32 %s20, 2
        // Predicated region
        $region65: #{gan_forward.1} parent=63 // pred_check
          %p1093 = pneg %p243
        $region66: #{gan_forward.1} parent=63 // pred_check_branch
          %1095 = sbr.rel (%p1093) target = $region68
        $region67: #{gan_forward.1} parent=63 // pred_region
          %s1096 = sand.u32 %s228, 1
          %s1097 = scalar_lea.sflag [#allocation4], %s1096
          %s1098 = sand.u32 %s228, 1
          %s1099 = scalar_lea.vmem [#allocation3], %s1098
          %1100 = dma.done %s1097, 16
        $region68: #{gan_forward.1} parent=63 // pred_fallthru
          _
      $region64: #{gan_forward.1} parent=5 // pred_fallthru
        _
    $region6: #{gan_forward.1} parent=1 // loop_footer
      %s24 = sadd.s32 1, %s20
    $region7: #{gan_forward.1} parent=1 // loop_footer_branch
      %19 = sbr.rel target = $region3
    $region8: #{gan_forward.1} parent=1 // loop_exit
      _
    %1101 = vsyncpa [#allocation4], 1
    %s1102 = scalar_lea.sflag [#allocation4], 1
    %1103 = vsyncpa %s1102, 1

</llo_original>
